<compile_context>
chip_gen: v5e
topology: v5e:2x2
jax: 0.10.0
libtpu: 0.0.40
codegen_flags: <defaults>
</compile_context>

<pallas_src>
import functools

import jax
import jax.numpy as jnp
from jax import lax
from jax.experimental import pallas as pl
from jax.experimental.pallas import tpu as pltpu

# Lane padding on each side of the flattened activation.  128 keeps the interior
# vreg-aligned and comfortably covers the +-(W+1) tap shifts.
_PAD = 128


def _decode_block_kernel(*refs, H, W, num_layers, alpha, last_has_act):
    # refs layout: x_ref, (w_ref, b_ref) * num_layers, o_ref
    x_ref = refs[0]
    o_ref = refs[1 + 2 * num_layers]
    f32 = jnp.float32
    HW = H * W

    # Column index of every flattened spatial position.  Only the two column-wrap
    # tap groups (kw=0 / kw=2) need masking; the row halo is covered by the lane pad.
    col = lax.broadcasted_iota(jnp.int32, (1, HW), 1) % W
    keep_left = col > 0           # valid output positions for taps reading column j-1
    keep_right = col < (W - 1)    # valid output positions for taps reading column j+1

    act = x_ref[...].astype(f32)                          # (c_in, H*W), lane-dense

    for layer in range(num_layers):
        w_ref = refs[1 + 2 * layer]                        # (cout, 9*cin) packed taps
        b_ref = refs[2 + 2 * layer]                        # (cout, 1)
        cin = act.shape[0]

        # Zero-padded copy of the flattened activation: rows falling outside the image
        # read zeros from the pad, so no row masks are needed.
        zpad = jnp.zeros((cin, _PAD), f32)
        padded = jnp.concatenate([zpad, act, zpad], axis=1)    # (cin, 2*_PAD + H*W)

        # im2col operand: 9 statically shifted lane slices stacked along K.
        # Row ordering r = (kh*3 + kw)*cin + ci matches the wrapper's weight packing.
        taps = []
        for kh in range(3):
            for kw in range(3):
                s = (kh - 1) * W + (kw - 1)
                t = padded[:, _PAD + s:_PAD + s + HW]          # (cin, H*W)
                if kw == 0:
                    t = jnp.where(keep_left, t, 0.0)
                elif kw == 2:
                    t = jnp.where(keep_right, t, 0.0)
                taps.append(t)
        im2col = jnp.concatenate(taps, axis=0)                 # (9*cin, H*W)

        # One fat-K MXU matmul per layer; bias + LeakyReLU fused in the f32 epilogue.
        acc = jnp.dot(w_ref[...].astype(f32), im2col,
                      preferred_element_type=f32)              # (cout, H*W)
        acc = acc + b_ref[...].astype(f32)
        if layer < num_layers - 1 or last_has_act:
            acc = jnp.where(acc > 0, acc, alpha * acc)         # LeakyReLU(0.1)
        act = acc

    o_ref[...] = act.astype(o_ref.dtype)                       # lane-dense store


def decode_block_forward(params, x_nchw, *, flag=False, alpha=0.1):
    """Forward pass matching PyTorch DecodeBlock. Input/output are NCHW."""
    N, c_in, H, W = x_nchw.shape
    # Free reshape: (N, C, H, W) -> (N, C, H*W); no transposes on either side.
    x_flat = x_nchw.reshape(N, c_in, H * W)

    layer_names = ["conv1", "conv2"] + (["conv3"] if flag else [])
    num_layers = len(layer_names)

    wb_args, wb_specs = [], []
    c_prev = c_in
    for name in layer_names:
        w_hwio, b = params[name]                       # (3, 3, cin, cout), (cout,)
        cin, cout = w_hwio.shape[2], w_hwio.shape[3]
        assert cin == c_prev
        # Pack the 9 taps along K: (cout, 9*cin), row r = (kh*3 + kw)*cin + ci.
        w_mat = jnp.transpose(w_hwio, (3, 0, 1, 2)).reshape(cout, 9 * cin)
        b_col = b.reshape(cout, 1)
        wb_args += [w_mat, b_col]
        wb_specs += [
            pl.BlockSpec(w_mat.shape, lambda n: (0, 0)),
            pl.BlockSpec(b_col.shape, lambda n: (0, 0)),
        ]
        c_prev = cout
    c_last = c_prev

    kernel = functools.partial(
        _decode_block_kernel, H=H, W=W, num_layers=num_layers,
        alpha=alpha, last_has_act=not flag)

    # TODO(synk): for production-sized activations add an H-row grid axis (1-row halo)
    # + vmem_limit_bytes, and cast matmul operands to bf16 on v6e/v7x (keep f32 accum).
    out_flat = pl.pallas_call(
        kernel,
        out_shape=jax.ShapeDtypeStruct((N, c_last, H * W), x_nchw.dtype),
        grid_spec=pltpu.PrefetchScalarGridSpec(
            num_scalar_prefetch=0,
            grid=(N,),
            in_specs=[pl.BlockSpec((None, c_in, H * W), lambda n: (n, 0, 0))]
                     + wb_specs,
            out_specs=pl.BlockSpec((None, c_last, H * W), lambda n: (n, 0, 0)),
        ),
        compiler_params=pltpu.CompilerParams(
            dimension_semantics=("parallel",),
        ),
    )(x_flat, *wb_args)

    # Free reshape: (N, C, H*W) -> (N, C, H, W).  Output is already NCHW.
    return out_flat.reshape(N, c_last, H, W)


def init_decode_block_params(key, in_channel, mid_channel, out_channel,
                             final_channel=3, flag=False, dtype=jnp.float32):
    """Deterministic synthetic parameters (PyTorch OIHW conv shapes -> stored as HWIO)."""
    keys = jax.random.split(key, 6)

    def conv_params(kw, kb, cin, cout):
        # PyTorch Conv2d weight shape: (cout, cin, 3, 3); store as HWIO (3, 3, cin, cout)
        w_oihw = jax.random.normal(kw, (cout, cin, 3, 3), dtype) * 0.1
        b = jax.random.normal(kb, (cout,), dtype) * 0.1
        w_hwio = jnp.transpose(w_oihw, (2, 3, 1, 0))
        return w_hwio, b

    params = {}
    params["conv1"] = conv_params(keys[0], keys[1], in_channel, mid_channel)
    params["conv2"] = conv_params(keys[2], keys[3], mid_channel, out_channel)
    if flag:
        params["conv3"] = conv_params(keys[4], keys[5], out_channel, final_channel)
    return params


def _reference_forward(params, x_nchw, *, flag=False):
    """Pure-JAX reference (lax conv) for correctness checking."""
    x = jnp.transpose(x_nchw, (0, 2, 3, 1))
    dn = lax.conv_dimension_numbers(x.shape, params["conv1"][0].shape,
                                    ("NHWC", "HWIO", "NHWC"))

    def conv(v, w, b):
        y = lax.conv_general_dilated(v, w, (1, 1), ((1, 1), (1, 1)),
                                     dimension_numbers=dn)
        return y + b.reshape(1, 1, 1, -1)

    def lrelu(v):
        return jnp.where(v > 0, v, 0.1 * v)

    out = lrelu(conv(x, *params["conv1"]))
    out = lrelu(conv(out, *params["conv2"]))
    if flag:
        out = conv(out, *params["conv3"])
    return jnp.transpose(out, (0, 3, 1, 2))


if __name__ == "__main__":
    key = jax.random.PRNGKey(0)
    k_x, k_p = jax.random.split(key)

    # Small shapes consistent with the module: N=2, in=4, mid=8, out=8, final=3, 16x16.
    N, C_in, C_mid, C_out, C_final, H, W = 2, 4, 8, 8, 3, 16, 16

    x = jax.random.normal(k_x, (N, C_in, H, W), jnp.float32)

    for flag in (True, False):
        params = init_decode_block_params(k_p, C_in, C_mid, C_out, C_final, flag=flag)
        out = jax.block_until_ready(decode_block_forward(params, x, flag=flag))
        ref = jax.block_until_ready(_reference_forward(params, x, flag=flag))
        expect_c = C_final if flag else C_out
        assert out.shape == (N, expect_c, H, W), out.shape
        assert jnp.allclose(out, ref, atol=1e-4, rtol=1e-4), f"mismatch (flag={flag})"

    print("KERNEL_OK")
</pallas_src>

<mosaic_0001>
module attributes {stable_mosaic.version = 11 : i64} {
  func.func @_decode_block_kernel(%arg0: i32, %arg1: memref<1x4x256xf32, #tpu.memory_space<vmem>>, %arg2: memref<8x36xf32, #tpu.memory_space<vmem>>, %arg3: memref<8x1xf32, #tpu.memory_space<vmem>>, %arg4: memref<8x72xf32, #tpu.memory_space<vmem>>, %arg5: memref<8x1xf32, #tpu.memory_space<vmem>>, %arg6: memref<3x72xf32, #tpu.memory_space<vmem>>, %arg7: memref<3x1xf32, #tpu.memory_space<vmem>>, %arg8: memref<1x3x256xf32, #tpu.memory_space<vmem>>) attributes {dimension_semantics = [#tpu.dimension_semantics<parallel>], iteration_bounds = array<i64: 2>, scalar_prefetch = 0 : i64, scratch_operands = 0 : i64, tpu.core_type = #tpu.core_type<tc>, window_params = [{transform_indices = @transform_0, window_bounds = array<i64: 1, 4, 256>}, {pipeline_mode = #tpu.pipeline_mode<synchronous>, transform_indices = @transform_1, window_bounds = array<i64: 8, 36>}, {pipeline_mode = #tpu.pipeline_mode<synchronous>, transform_indices = @transform_2, window_bounds = array<i64: 8, 1>}, {pipeline_mode = #tpu.pipeline_mode<synchronous>, transform_indices = @transform_3, window_bounds = array<i64: 8, 72>}, {pipeline_mode = #tpu.pipeline_mode<synchronous>, transform_indices = @transform_4, window_bounds = array<i64: 8, 1>}, {pipeline_mode = #tpu.pipeline_mode<synchronous>, transform_indices = @transform_5, window_bounds = array<i64: 3, 72>}, {pipeline_mode = #tpu.pipeline_mode<synchronous>, transform_indices = @transform_6, window_bounds = array<i64: 3, 1>}, {transform_indices = @transform_7, window_bounds = array<i64: 1, 3, 256>}]} {
    %0 = tpu.iota {dimensions = array<i32: 1>} : vector<1x256xi32>
    %c16_i32 = arith.constant 16 : i32
    %c0_i32 = arith.constant 0 : i32
    %1 = arith.cmpi eq, %c16_i32, %c0_i32 : i32
    %c1_i32 = arith.constant 1 : i32
    %2 = arith.select %1, %c1_i32, %c16_i32 : i32
    %3 = vector.broadcast %2 : i32 to vector<1x256xi32>
    %4 = arith.remsi %0, %3 : vector<1x256xi32>
    %c0_i32_0 = arith.constant 0 : i32
    %5 = vector.broadcast %c0_i32_0 : i32 to vector<1x256xi32>
    %6 = arith.cmpi ne, %4, %5 : vector<1x256xi32>
    %c0_i32_1 = arith.constant 0 : i32
    %7 = vector.broadcast %c0_i32_1 : i32 to vector<1x256xi32>
    %8 = arith.cmpi slt, %4, %7 : vector<1x256xi32>
    %c0_i32_2 = arith.constant 0 : i32
    %9 = arith.cmpi slt, %2, %c0_i32_2 : i32
    %10 = vector.broadcast %9 : i1 to vector<1x256xi1>
    %11 = vector.broadcast %10 : vector<1x256xi1> to vector<1x256xi1>
    %12 = arith.xori %8, %11 : vector<1x256xi1>
    %13 = arith.andi %12, %6 : vector<1x256xi1>
    %14 = vector.broadcast %2 : i32 to vector<1x256xi32>
    %15 = arith.addi %4, %14 : vector<1x256xi32>
    %16 = arith.select %13, %15, %4 : vector<1x256xi1>, vector<1x256xi32>
    %c0_i32_3 = arith.constant 0 : i32
    %17 = vector.broadcast %c0_i32_3 : i32 to vector<1x256xi32>
    %18 = arith.cmpi sgt, %16, %17 : vector<1x256xi32>
    %c15_i32 = arith.constant 15 : i32
    %19 = vector.broadcast %c15_i32 : i32 to vector<1x256xi32>
    %20 = arith.cmpi slt, %16, %19 : vector<1x256xi32>
    %c0 = arith.constant 0 : index
    %c0_4 = arith.constant 0 : index
    %c0_5 = arith.constant 0 : index
    %21 = vector.load %arg1[%c0, %c0_4, %c0_5] : memref<1x4x256xf32, #tpu.memory_space<vmem>>, vector<1x4x256xf32>
    %22 = vector.shape_cast %21 : vector<1x4x256xf32> to vector<4x256xf32>
    %cst = arith.constant 0.000000e+00 : f32
    %23 = vector.broadcast %cst : f32 to vector<4x128xf32>
    %24 = tpu.concatenate %23, %22, %23 in 1 : vector<4x128xf32>, vector<4x256xf32>, vector<4x128xf32> -> vector<4x512xf32>
    %25 = vector.extract_strided_slice %24 {offsets = [0, 111], sizes = [4, 256], strides = [1, 1]} : vector<4x512xf32> to vector<4x256xf32>
    %cst_6 = arith.constant 0.000000e+00 : f32
    %26 = vector.shape_cast %18 : vector<1x256xi1> to vector<1x256xi1>
    %27 = vector.broadcast %26 : vector<1x256xi1> to vector<4x256xi1>
    %28 = vector.broadcast %cst_6 : f32 to vector<4x256xf32>
    %29 = arith.select %27, %25, %28 : vector<4x256xi1>, vector<4x256xf32>
    %30 = vector.extract_strided_slice %24 {offsets = [0, 112], sizes = [4, 256], strides = [1, 1]} : vector<4x512xf32> to vector<4x256xf32>
    %31 = vector.extract_strided_slice %24 {offsets = [0, 113], sizes = [4, 256], strides = [1, 1]} : vector<4x512xf32> to vector<4x256xf32>
    %cst_7 = arith.constant 0.000000e+00 : f32
    %32 = vector.shape_cast %20 : vector<1x256xi1> to vector<1x256xi1>
    %33 = vector.broadcast %32 : vector<1x256xi1> to vector<4x256xi1>
    %34 = vector.broadcast %cst_7 : f32 to vector<4x256xf32>
    %35 = arith.select %33, %31, %34 : vector<4x256xi1>, vector<4x256xf32>
    %36 = vector.extract_strided_slice %24 {offsets = [0, 127], sizes = [4, 256], strides = [1, 1]} : vector<4x512xf32> to vector<4x256xf32>
    %cst_8 = arith.constant 0.000000e+00 : f32
    %37 = vector.shape_cast %18 : vector<1x256xi1> to vector<1x256xi1>
    %38 = vector.broadcast %37 : vector<1x256xi1> to vector<4x256xi1>
    %39 = vector.broadcast %cst_8 : f32 to vector<4x256xf32>
    %40 = arith.select %38, %36, %39 : vector<4x256xi1>, vector<4x256xf32>
    %41 = vector.extract_strided_slice %24 {offsets = [0, 128], sizes = [4, 256], strides = [1, 1]} : vector<4x512xf32> to vector<4x256xf32>
    %42 = vector.extract_strided_slice %24 {offsets = [0, 129], sizes = [4, 256], strides = [1, 1]} : vector<4x512xf32> to vector<4x256xf32>
    %cst_9 = arith.constant 0.000000e+00 : f32
    %43 = vector.shape_cast %20 : vector<1x256xi1> to vector<1x256xi1>
    %44 = vector.broadcast %43 : vector<1x256xi1> to vector<4x256xi1>
    %45 = vector.broadcast %cst_9 : f32 to vector<4x256xf32>
    %46 = arith.select %44, %42, %45 : vector<4x256xi1>, vector<4x256xf32>
    %47 = vector.extract_strided_slice %24 {offsets = [0, 143], sizes = [4, 256], strides = [1, 1]} : vector<4x512xf32> to vector<4x256xf32>
    %cst_10 = arith.constant 0.000000e+00 : f32
    %48 = vector.shape_cast %18 : vector<1x256xi1> to vector<1x256xi1>
    %49 = vector.broadcast %48 : vector<1x256xi1> to vector<4x256xi1>
    %50 = vector.broadcast %cst_10 : f32 to vector<4x256xf32>
    %51 = arith.select %49, %47, %50 : vector<4x256xi1>, vector<4x256xf32>
    %52 = vector.extract_strided_slice %24 {offsets = [0, 144], sizes = [4, 256], strides = [1, 1]} : vector<4x512xf32> to vector<4x256xf32>
    %53 = vector.extract_strided_slice %24 {offsets = [0, 145], sizes = [4, 256], strides = [1, 1]} : vector<4x512xf32> to vector<4x256xf32>
    %cst_11 = arith.constant 0.000000e+00 : f32
    %54 = vector.shape_cast %20 : vector<1x256xi1> to vector<1x256xi1>
    %55 = vector.broadcast %54 : vector<1x256xi1> to vector<4x256xi1>
    %56 = vector.broadcast %cst_11 : f32 to vector<4x256xf32>
    %57 = arith.select %55, %53, %56 : vector<4x256xi1>, vector<4x256xf32>
    %58 = tpu.concatenate %29, %30, %35, %40, %41, %46, %51, %52, %57 in 0 : vector<4x256xf32>, vector<4x256xf32>, vector<4x256xf32>, vector<4x256xf32>, vector<4x256xf32>, vector<4x256xf32>, vector<4x256xf32>, vector<4x256xf32>, vector<4x256xf32> -> vector<36x256xf32>
    %c0_12 = arith.constant 0 : index
    %c0_13 = arith.constant 0 : index
    %59 = vector.load %arg2[%c0_12, %c0_13] : memref<8x36xf32, #tpu.memory_space<vmem>>, vector<8x36xf32>
    %cst_14 = arith.constant dense<0.000000e+00> : vector<8x256xf32>
    %60 = tpu.matmul %59, %58, %cst_14 {dimension_numbers = #tpu.dot_dimension_numbers<[1], [0], [0], [1], [0, 0, 1, 1], [], []>} : vector<8x36xf32>, vector<36x256xf32>, vector<8x256xf32> -> vector<8x256xf32>
    %c0_15 = arith.constant 0 : index
    %c0_16 = arith.constant 0 : index
    %61 = vector.load %arg3[%c0_15, %c0_16] : memref<8x1xf32, #tpu.memory_space<vmem>>, vector<8x1xf32>
    %62 = vector.broadcast %61 : vector<8x1xf32> to vector<8x256xf32>
    %63 = arith.addf %60, %62 : vector<8x256xf32>
    %cst_17 = arith.constant 0.000000e+00 : f32
    %64 = vector.broadcast %cst_17 : f32 to vector<8x256xf32>
    %65 = arith.cmpf ogt, %63, %64 : vector<8x256xf32>
    %cst_18 = arith.constant 1.000000e-01 : f32
    %66 = vector.broadcast %cst_18 : f32 to vector<8x256xf32>
    %67 = arith.mulf %66, %63 : vector<8x256xf32>
    %68 = arith.select %65, %63, %67 : vector<8x256xi1>, vector<8x256xf32>
    %cst_19 = arith.constant 0.000000e+00 : f32
    %69 = vector.broadcast %cst_19 : f32 to vector<8x128xf32>
    %70 = tpu.concatenate %69, %68, %69 in 1 : vector<8x128xf32>, vector<8x256xf32>, vector<8x128xf32> -> vector<8x512xf32>
    %71 = vector.extract_strided_slice %70 {offsets = [0, 111], sizes = [8, 256], strides = [1, 1]} : vector<8x512xf32> to vector<8x256xf32>
    %cst_20 = arith.constant 0.000000e+00 : f32
    %72 = vector.shape_cast %18 : vector<1x256xi1> to vector<1x256xi1>
    %73 = vector.broadcast %72 : vector<1x256xi1> to vector<8x256xi1>
    %74 = vector.broadcast %cst_20 : f32 to vector<8x256xf32>
    %75 = arith.select %73, %71, %74 : vector<8x256xi1>, vector<8x256xf32>
    %76 = vector.extract_strided_slice %70 {offsets = [0, 112], sizes = [8, 256], strides = [1, 1]} : vector<8x512xf32> to vector<8x256xf32>
    %77 = vector.extract_strided_slice %70 {offsets = [0, 113], sizes = [8, 256], strides = [1, 1]} : vector<8x512xf32> to vector<8x256xf32>
    %cst_21 = arith.constant 0.000000e+00 : f32
    %78 = vector.shape_cast %20 : vector<1x256xi1> to vector<1x256xi1>
    %79 = vector.broadcast %78 : vector<1x256xi1> to vector<8x256xi1>
    %80 = vector.broadcast %cst_21 : f32 to vector<8x256xf32>
    %81 = arith.select %79, %77, %80 : vector<8x256xi1>, vector<8x256xf32>
    %82 = vector.extract_strided_slice %70 {offsets = [0, 127], sizes = [8, 256], strides = [1, 1]} : vector<8x512xf32> to vector<8x256xf32>
    %cst_22 = arith.constant 0.000000e+00 : f32
    %83 = vector.shape_cast %18 : vector<1x256xi1> to vector<1x256xi1>
    %84 = vector.broadcast %83 : vector<1x256xi1> to vector<8x256xi1>
    %85 = vector.broadcast %cst_22 : f32 to vector<8x256xf32>
    %86 = arith.select %84, %82, %85 : vector<8x256xi1>, vector<8x256xf32>
    %87 = vector.extract_strided_slice %70 {offsets = [0, 128], sizes = [8, 256], strides = [1, 1]} : vector<8x512xf32> to vector<8x256xf32>
    %88 = vector.extract_strided_slice %70 {offsets = [0, 129], sizes = [8, 256], strides = [1, 1]} : vector<8x512xf32> to vector<8x256xf32>
    %cst_23 = arith.constant 0.000000e+00 : f32
    %89 = vector.shape_cast %20 : vector<1x256xi1> to vector<1x256xi1>
    %90 = vector.broadcast %89 : vector<1x256xi1> to vector<8x256xi1>
    %91 = vector.broadcast %cst_23 : f32 to vector<8x256xf32>
    %92 = arith.select %90, %88, %91 : vector<8x256xi1>, vector<8x256xf32>
    %93 = vector.extract_strided_slice %70 {offsets = [0, 143], sizes = [8, 256], strides = [1, 1]} : vector<8x512xf32> to vector<8x256xf32>
    %cst_24 = arith.constant 0.000000e+00 : f32
    %94 = vector.shape_cast %18 : vector<1x256xi1> to vector<1x256xi1>
    %95 = vector.broadcast %94 : vector<1x256xi1> to vector<8x256xi1>
    %96 = vector.broadcast %cst_24 : f32 to vector<8x256xf32>
    %97 = arith.select %95, %93, %96 : vector<8x256xi1>, vector<8x256xf32>
    %98 = vector.extract_strided_slice %70 {offsets = [0, 144], sizes = [8, 256], strides = [1, 1]} : vector<8x512xf32> to vector<8x256xf32>
    %99 = vector.extract_strided_slice %70 {offsets = [0, 145], sizes = [8, 256], strides = [1, 1]} : vector<8x512xf32> to vector<8x256xf32>
    %cst_25 = arith.constant 0.000000e+00 : f32
    %100 = vector.shape_cast %20 : vector<1x256xi1> to vector<1x256xi1>
    %101 = vector.broadcast %100 : vector<1x256xi1> to vector<8x256xi1>
    %102 = vector.broadcast %cst_25 : f32 to vector<8x256xf32>
    %103 = arith.select %101, %99, %102 : vector<8x256xi1>, vector<8x256xf32>
    %104 = tpu.concatenate %75, %76, %81, %86, %87, %92, %97, %98, %103 in 0 : vector<8x256xf32>, vector<8x256xf32>, vector<8x256xf32>, vector<8x256xf32>, vector<8x256xf32>, vector<8x256xf32>, vector<8x256xf32>, vector<8x256xf32>, vector<8x256xf32> -> vector<72x256xf32>
    %c0_26 = arith.constant 0 : index
    %c0_27 = arith.constant 0 : index
    %105 = vector.load %arg4[%c0_26, %c0_27] : memref<8x72xf32, #tpu.memory_space<vmem>>, vector<8x72xf32>
    %cst_28 = arith.constant dense<0.000000e+00> : vector<8x256xf32>
    %106 = tpu.matmul %105, %104, %cst_28 {dimension_numbers = #tpu.dot_dimension_numbers<[1], [0], [0], [1], [0, 0, 1, 1], [], []>} : vector<8x72xf32>, vector<72x256xf32>, vector<8x256xf32> -> vector<8x256xf32>
    %c0_29 = arith.constant 0 : index
    %c0_30 = arith.constant 0 : index
    %107 = vector.load %arg5[%c0_29, %c0_30] : memref<8x1xf32, #tpu.memory_space<vmem>>, vector<8x1xf32>
    %108 = vector.broadcast %107 : vector<8x1xf32> to vector<8x256xf32>
    %109 = arith.addf %106, %108 : vector<8x256xf32>
    %cst_31 = arith.constant 0.000000e+00 : f32
    %110 = vector.broadcast %cst_31 : f32 to vector<8x256xf32>
    %111 = arith.cmpf ogt, %109, %110 : vector<8x256xf32>
    %cst_32 = arith.constant 1.000000e-01 : f32
    %112 = vector.broadcast %cst_32 : f32 to vector<8x256xf32>
    %113 = arith.mulf %112, %109 : vector<8x256xf32>
    %114 = arith.select %111, %109, %113 : vector<8x256xi1>, vector<8x256xf32>
    %cst_33 = arith.constant 0.000000e+00 : f32
    %115 = vector.broadcast %cst_33 : f32 to vector<8x128xf32>
    %116 = tpu.concatenate %115, %114, %115 in 1 : vector<8x128xf32>, vector<8x256xf32>, vector<8x128xf32> -> vector<8x512xf32>
    %117 = vector.extract_strided_slice %116 {offsets = [0, 111], sizes = [8, 256], strides = [1, 1]} : vector<8x512xf32> to vector<8x256xf32>
    %cst_34 = arith.constant 0.000000e+00 : f32
    %118 = vector.shape_cast %18 : vector<1x256xi1> to vector<1x256xi1>
    %119 = vector.broadcast %118 : vector<1x256xi1> to vector<8x256xi1>
    %120 = vector.broadcast %cst_34 : f32 to vector<8x256xf32>
    %121 = arith.select %119, %117, %120 : vector<8x256xi1>, vector<8x256xf32>
    %122 = vector.extract_strided_slice %116 {offsets = [0, 112], sizes = [8, 256], strides = [1, 1]} : vector<8x512xf32> to vector<8x256xf32>
    %123 = vector.extract_strided_slice %116 {offsets = [0, 113], sizes = [8, 256], strides = [1, 1]} : vector<8x512xf32> to vector<8x256xf32>
    %cst_35 = arith.constant 0.000000e+00 : f32
    %124 = vector.shape_cast %20 : vector<1x256xi1> to vector<1x256xi1>
    %125 = vector.broadcast %124 : vector<1x256xi1> to vector<8x256xi1>
    %126 = vector.broadcast %cst_35 : f32 to vector<8x256xf32>
    %127 = arith.select %125, %123, %126 : vector<8x256xi1>, vector<8x256xf32>
    %128 = vector.extract_strided_slice %116 {offsets = [0, 127], sizes = [8, 256], strides = [1, 1]} : vector<8x512xf32> to vector<8x256xf32>
    %cst_36 = arith.constant 0.000000e+00 : f32
    %129 = vector.shape_cast %18 : vector<1x256xi1> to vector<1x256xi1>
    %130 = vector.broadcast %129 : vector<1x256xi1> to vector<8x256xi1>
    %131 = vector.broadcast %cst_36 : f32 to vector<8x256xf32>
    %132 = arith.select %130, %128, %131 : vector<8x256xi1>, vector<8x256xf32>
    %133 = vector.extract_strided_slice %116 {offsets = [0, 128], sizes = [8, 256], strides = [1, 1]} : vector<8x512xf32> to vector<8x256xf32>
    %134 = vector.extract_strided_slice %116 {offsets = [0, 129], sizes = [8, 256], strides = [1, 1]} : vector<8x512xf32> to vector<8x256xf32>
    %cst_37 = arith.constant 0.000000e+00 : f32
    %135 = vector.shape_cast %20 : vector<1x256xi1> to vector<1x256xi1>
    %136 = vector.broadcast %135 : vector<1x256xi1> to vector<8x256xi1>
    %137 = vector.broadcast %cst_37 : f32 to vector<8x256xf32>
    %138 = arith.select %136, %134, %137 : vector<8x256xi1>, vector<8x256xf32>
    %139 = vector.extract_strided_slice %116 {offsets = [0, 143], sizes = [8, 256], strides = [1, 1]} : vector<8x512xf32> to vector<8x256xf32>
    %cst_38 = arith.constant 0.000000e+00 : f32
    %140 = vector.shape_cast %18 : vector<1x256xi1> to vector<1x256xi1>
    %141 = vector.broadcast %140 : vector<1x256xi1> to vector<8x256xi1>
    %142 = vector.broadcast %cst_38 : f32 to vector<8x256xf32>
    %143 = arith.select %141, %139, %142 : vector<8x256xi1>, vector<8x256xf32>
    %144 = vector.extract_strided_slice %116 {offsets = [0, 144], sizes = [8, 256], strides = [1, 1]} : vector<8x512xf32> to vector<8x256xf32>
    %145 = vector.extract_strided_slice %116 {offsets = [0, 145], sizes = [8, 256], strides = [1, 1]} : vector<8x512xf32> to vector<8x256xf32>
    %cst_39 = arith.constant 0.000000e+00 : f32
    %146 = vector.shape_cast %20 : vector<1x256xi1> to vector<1x256xi1>
    %147 = vector.broadcast %146 : vector<1x256xi1> to vector<8x256xi1>
    %148 = vector.broadcast %cst_39 : f32 to vector<8x256xf32>
    %149 = arith.select %147, %145, %148 : vector<8x256xi1>, vector<8x256xf32>
    %150 = tpu.concatenate %121, %122, %127, %132, %133, %138, %143, %144, %149 in 0 : vector<8x256xf32>, vector<8x256xf32>, vector<8x256xf32>, vector<8x256xf32>, vector<8x256xf32>, vector<8x256xf32>, vector<8x256xf32>, vector<8x256xf32>, vector<8x256xf32> -> vector<72x256xf32>
    %c0_40 = arith.constant 0 : index
    %c0_41 = arith.constant 0 : index
    %151 = vector.load %arg6[%c0_40, %c0_41] : memref<3x72xf32, #tpu.memory_space<vmem>>, vector<3x72xf32>
    %cst_42 = arith.constant dense<0.000000e+00> : vector<3x256xf32>
    %152 = tpu.matmul %151, %150, %cst_42 {dimension_numbers = #tpu.dot_dimension_numbers<[1], [0], [0], [1], [0, 0, 1, 1], [], []>} : vector<3x72xf32>, vector<72x256xf32>, vector<3x256xf32> -> vector<3x256xf32>
    %c0_43 = arith.constant 0 : index
    %c0_44 = arith.constant 0 : index
    %153 = vector.load %arg7[%c0_43, %c0_44] : memref<3x1xf32, #tpu.memory_space<vmem>>, vector<3x1xf32>
    %154 = vector.broadcast %153 : vector<3x1xf32> to vector<3x256xf32>
    %155 = arith.addf %152, %154 : vector<3x256xf32>
    %c0_45 = arith.constant 0 : index
    %c0_46 = arith.constant 0 : index
    %c0_47 = arith.constant 0 : index
    %156 = vector.load %arg8[%c0_45, %c0_46, %c0_47] : memref<1x3x256xf32, #tpu.memory_space<vmem>>, vector<1x3x256xf32>
    %157 = vector.shape_cast %156 : vector<1x3x256xf32> to vector<3x256xf32>
    %158 = vector.shape_cast %155 : vector<3x256xf32> to vector<1x3x256xf32>
    tpu.vector_store %arg8[%c0_45, %c0_46, %c0_47], %158 {strides = array<i32>} : memref<1x3x256xf32, #tpu.memory_space<vmem>>, vector<1x3x256xf32>,
    return
  }
  func.func @transform_0(%arg0: i32) -> (i32, i32, i32) {
    %c0_i32 = arith.constant 0 : i32
    %c0_i32_0 = arith.constant 0 : i32
    %c0_i32_1 = arith.constant 0 : i32
    return %arg0, %c0_i32, %c0_i32_0 : i32, i32, i32
  }
  func.func @transform_1(%arg0: i32) -> (i32, i32) {
    %c0_i32 = arith.constant 0 : i32
    %c0_i32_0 = arith.constant 0 : i32
    %c0_i32_1 = arith.constant 0 : i32
    return %c0_i32, %c0_i32_0 : i32, i32
  }
  func.func @transform_2(%arg0: i32) -> (i32, i32) {
    %c0_i32 = arith.constant 0 : i32
    %c0_i32_0 = arith.constant 0 : i32
    %c0_i32_1 = arith.constant 0 : i32
    return %c0_i32, %c0_i32_0 : i32, i32
  }
  func.func @transform_3(%arg0: i32) -> (i32, i32) {
    %c0_i32 = arith.constant 0 : i32
    %c0_i32_0 = arith.constant 0 : i32
    %c0_i32_1 = arith.constant 0 : i32
    return %c0_i32, %c0_i32_0 : i32, i32
  }
  func.func @transform_4(%arg0: i32) -> (i32, i32) {
    %c0_i32 = arith.constant 0 : i32
    %c0_i32_0 = arith.constant 0 : i32
    %c0_i32_1 = arith.constant 0 : i32
    return %c0_i32, %c0_i32_0 : i32, i32
  }
  func.func @transform_5(%arg0: i32) -> (i32, i32) {
    %c0_i32 = arith.constant 0 : i32
    %c0_i32_0 = arith.constant 0 : i32
    %c0_i32_1 = arith.constant 0 : i32
    return %c0_i32, %c0_i32_0 : i32, i32
  }
  func.func @transform_6(%arg0: i32) -> (i32, i32) {
    %c0_i32 = arith.constant 0 : i32
    %c0_i32_0 = arith.constant 0 : i32
    %c0_i32_1 = arith.constant 0 : i32
    return %c0_i32, %c0_i32_0 : i32, i32
  }
  func.func @transform_7(%arg0: i32) -> (i32, i32, i32) {
    %c0_i32 = arith.constant 0 : i32
    %c0_i32_0 = arith.constant 0 : i32
    %c0_i32_1 = arith.constant 0 : i32
    return %arg0, %c0_i32, %c0_i32_0 : i32, i32, i32
  }
}

</mosaic_0001>

<llo_original>
// kernel: tpu_custom_call.1
$region0: #{tpu_custom_call.1}
  #allocation0 [shape = 'u32[]', space=smem, size = 0x4, offset = 0x4, fixed_abs, tag = 'smem constant byte address 0x4 - core index']
  #allocation1 [shape = 'u32[72,128]{1,0:T(1,128)}', space=vmem, size = 0x9000, scoped, tag = 'internal scratch']
  %s0 = inlined_call_operand.vmem [shape: f32[2,4,256], index: 0, kind: input, shape index: {}]
  %s1 = inlined_call_operand.hbm [shape: f32[8,36], index: 1, kind: input, shape index: {}]
  %s2 = inlined_call_operand.vmem [shape: f32[8,1], index: 2, kind: input, shape index: {}]
  %s3 = inlined_call_operand.hbm [shape: f32[8,72], index: 3, kind: input, shape index: {}]
  %s4 = inlined_call_operand.vmem [shape: f32[8,1], index: 4, kind: input, shape index: {}]
  %s5 = inlined_call_operand.vmem [shape: f32[3,72], index: 5, kind: input, shape index: {}]
  %s6 = inlined_call_operand.vmem [shape: f32[3,1], index: 6, kind: input, shape index: {}]
  %s7 = inlined_call_operand.vmem [shape: f32[2,3,256], index: 7, kind: output, shape index: {}]
  %s8 = sld [smem:[#allocation0]]
  $region69: #{tpu_custom_call.1} parent=0
    _
  %s10 = ssub.s32 1, %s8
  %s11 = scalar_select 0, %s10, %s8
  $region1: #{tpu_custom_call.1} parent=0
    #allocation2 [shape = 'u8[4096]{0}', space=vmem, size = 0x1000, scoped, tag = 'input window, operand 1, single buffered']
    #allocation3 [shape = 's32[2]{0}', space=sflag, size = 0x8, scoped, tag = 'scoped memory for tpu_custom_call.1']
    #allocation4 [shape = 'u8[4096]{0}', space=vmem, size = 0x1000, scoped, tag = 'input window, operand 3, single buffered']
    #allocation5 [shape = 's32[1]{0}', space=sflag, size = 0x4, scoped, tag = 'scoped memory for tpu_custom_call.1']
    %12 = vsyncpa [#allocation3], 0
    %13 = vsyncpa [#allocation5], 0
    loop: start=0, step=1, limit=4
    $region2: #{tpu_custom_call.1} parent=1 // loop_pre_header
      _
    $region3: #{tpu_custom_call.1} parent=1 // loop_header
      %s15 = sphi 0, %s19
      %p16 = scmp.ge.s32.totalorder %s15, 4
      %s25 = sphi 0, %s27
      %s28 = sphi 0, %s25
      %s29 = sphi 0, %s28
      %s45 = sphi 0, %s29
      %s49 = sphi 0, %s49
      %s51 = sphi 0, %s49
      %s52 = sphi 0, %s51
      %s66 = sphi 0, %s52
      %s70 = sphi 0, %s70
      %s72 = sphi 0, %s70
      %s73 = sphi 0, %s72
      %s87 = sphi 0, %s73
      %s91 = sphi 0, %s91
      %s93 = sphi 0, %s91
      %s94 = sphi 0, %s93
      %s108 = sphi 0, %s94
      %s112 = sphi 0, %s112
      %s114 = sphi 0, %s112
      %s115 = sphi 0, %s114
      %s129 = sphi 0, %s115
      %s133 = sphi 0, %s133
      %s135 = sphi 0, %s133
      %s136 = sphi 0, %s135
      %s150 = sphi 0, %s136
      %s154 = sphi 0, %s154
      %s156 = sphi 0, %s154
      %s157 = sphi 0, %s156
      %s171 = sphi 0, %s157
      %s177 = sphi 0, %s179
      %s180 = sphi 0, %s177
      %s181 = sphi 0, %s180
      %s197 = sphi 0, %s181
    $region4: #{tpu_custom_call.1} parent=1 // loop_header_branch
      %18 = sbr.rel (%p16) target = $region8
    $region5: #{tpu_custom_call.1} parent=1 // loop_body
      %s20 = ssub.s32 %s15, 1
      %s21 = ssub.s32 %s15, 2
      %s22 = sadd.s32 %s15, 1
      %s23 = ssub.s32 %s15, %s22
      %p24 = scmp.eq.s32.totalorder %s23, 0
      %s26 = sadd.s32 %s25, 1
      %s27 = scalar_select %p24, %s25, %s26
      %p30 = pneg %p24
      %p31 = scmp.eq.s32.totalorder %s15, 1
      %p32 = por %p30, %p31
      %p33 = scmp.ne.s32.totalorder %s25, %s28
      %p34 = scmp.eq.s32.totalorder %s15, 0
      %p35 = por %p33, %p34
      %p36 = scmp.ne.s32.totalorder %s25, %s28
      %p37 = scmp.eq.s32.totalorder %s20, 1
      %p38 = por %p36, %p37
      %p39 = scmp.ne.s32.totalorder %s28, %s29
      %p40 = scmp.eq.s32.totalorder %s20, 0
      %p41 = por %p39, %p40
      %p42 = scmp.ne.s32.totalorder %s28, %s29
      %p43 = scmp.eq.s32.totalorder %s21, 1
      %p44 = por %p42, %p43
      %p46 = scmp.ne.s32.totalorder %s29, %s45
      %p47 = scmp.eq.s32.totalorder %s21, 0
      %p48 = por %p46, %p47
      %s50 = sadd.s32 %s49, 1
      %p53 = scmp.eq.s32.totalorder %s15, 1
      %p54 = scmp.ne.s32.totalorder %s49, %s51
      %p55 = scmp.eq.s32.totalorder %s15, 0
      %p56 = por %p54, %p55
      %p57 = scmp.ne.s32.totalorder %s49, %s51
      %p58 = scmp.eq.s32.totalorder %s20, 1
      %p59 = por %p57, %p58
      %p60 = scmp.ne.s32.totalorder %s51, %s52
      %p61 = scmp.eq.s32.totalorder %s20, 0
      %p62 = por %p60, %p61
      %p63 = scmp.ne.s32.totalorder %s51, %s52
      %p64 = scmp.eq.s32.totalorder %s21, 1
      %p65 = por %p63, %p64
      %p67 = scmp.ne.s32.totalorder %s52, %s66
      %p68 = scmp.eq.s32.totalorder %s21, 0
      %p69 = por %p67, %p68
      %s71 = sadd.s32 %s70, 1
      %p74 = scmp.eq.s32.totalorder %s15, 1
      %p75 = scmp.ne.s32.totalorder %s70, %s72
      %p76 = scmp.eq.s32.totalorder %s15, 0
      %p77 = por %p75, %p76
      %p78 = scmp.ne.s32.totalorder %s70, %s72
      %p79 = scmp.eq.s32.totalorder %s20, 1
      %p80 = por %p78, %p79
      %p81 = scmp.ne.s32.totalorder %s72, %s73
      %p82 = scmp.eq.s32.totalorder %s20, 0
      %p83 = por %p81, %p82
      %p84 = scmp.ne.s32.totalorder %s72, %s73
      %p85 = scmp.eq.s32.totalorder %s21, 1
      %p86 = por %p84, %p85
      %p88 = scmp.ne.s32.totalorder %s73, %s87
      %p89 = scmp.eq.s32.totalorder %s21, 0
      %p90 = por %p88, %p89
      %s92 = sadd.s32 %s91, 1
      %p95 = scmp.eq.s32.totalorder %s15, 1
      %p96 = scmp.ne.s32.totalorder %s91, %s93
      %p97 = scmp.eq.s32.totalorder %s15, 0
      %p98 = por %p96, %p97
      %p99 = scmp.ne.s32.totalorder %s91, %s93
      %p100 = scmp.eq.s32.totalorder %s20, 1
      %p101 = por %p99, %p100
      %p102 = scmp.ne.s32.totalorder %s93, %s94
      %p103 = scmp.eq.s32.totalorder %s20, 0
      %p104 = por %p102, %p103
      %p105 = scmp.ne.s32.totalorder %s93, %s94
      %p106 = scmp.eq.s32.totalorder %s21, 1
      %p107 = por %p105, %p106
      %p109 = scmp.ne.s32.totalorder %s94, %s108
      %p110 = scmp.eq.s32.totalorder %s21, 0
      %p111 = por %p109, %p110
      %s113 = sadd.s32 %s112, 1
      %p116 = scmp.eq.s32.totalorder %s15, 1
      %p117 = scmp.ne.s32.totalorder %s112, %s114
      %p118 = scmp.eq.s32.totalorder %s15, 0
      %p119 = por %p117, %p118
      %p120 = scmp.ne.s32.totalorder %s112, %s114
      %p121 = scmp.eq.s32.totalorder %s20, 1
      %p122 = por %p120, %p121
      %p123 = scmp.ne.s32.totalorder %s114, %s115
      %p124 = scmp.eq.s32.totalorder %s20, 0
      %p125 = por %p123, %p124
      %p126 = scmp.ne.s32.totalorder %s114, %s115
      %p127 = scmp.eq.s32.totalorder %s21, 1
      %p128 = por %p126, %p127
      %p130 = scmp.ne.s32.totalorder %s115, %s129
      %p131 = scmp.eq.s32.totalorder %s21, 0
      %p132 = por %p130, %p131
      %s134 = sadd.s32 %s133, 1
      %p137 = scmp.eq.s32.totalorder %s15, 1
      %p138 = scmp.ne.s32.totalorder %s133, %s135
      %p139 = scmp.eq.s32.totalorder %s15, 0
      %p140 = por %p138, %p139
      %p141 = scmp.ne.s32.totalorder %s133, %s135
      %p142 = scmp.eq.s32.totalorder %s20, 1
      %p143 = por %p141, %p142
      %p144 = scmp.ne.s32.totalorder %s135, %s136
      %p145 = scmp.eq.s32.totalorder %s20, 0
      %p146 = por %p144, %p145
      %p147 = scmp.ne.s32.totalorder %s135, %s136
      %p148 = scmp.eq.s32.totalorder %s21, 1
      %p149 = por %p147, %p148
      %p151 = scmp.ne.s32.totalorder %s136, %s150
      %p152 = scmp.eq.s32.totalorder %s21, 0
      %p153 = por %p151, %p152
      %s155 = sadd.s32 %s154, 1
      %p158 = scmp.eq.s32.totalorder %s15, 1
      %p159 = scmp.ne.s32.totalorder %s154, %s156
      %p160 = scmp.eq.s32.totalorder %s15, 0
      %p161 = por %p159, %p160
      %p162 = scmp.ne.s32.totalorder %s154, %s156
      %p163 = scmp.eq.s32.totalorder %s20, 1
      %p164 = por %p162, %p163
      %p165 = scmp.ne.s32.totalorder %s156, %s157
      %p166 = scmp.eq.s32.totalorder %s20, 0
      %p167 = por %p165, %p166
      %p168 = scmp.ne.s32.totalorder %s156, %s157
      %p169 = scmp.eq.s32.totalorder %s21, 1
      %p170 = por %p168, %p169
      %p172 = scmp.ne.s32.totalorder %s157, %s171
      %p173 = scmp.eq.s32.totalorder %s21, 0
      %p174 = por %p172, %p173
      %s175 = ssub.s32 %s15, %s22
      %p176 = scmp.eq.s32.totalorder %s175, 0
      %s178 = sadd.s32 %s177, 1
      %s179 = scalar_select %p176, %s177, %s178
      %p182 = pneg %p176
      %p183 = scmp.eq.s32.totalorder %s15, 1
      %p184 = por %p182, %p183
      %p185 = scmp.ne.s32.totalorder %s177, %s180
      %p186 = scmp.eq.s32.totalorder %s15, 0
      %p187 = por %p185, %p186
      %p188 = scmp.ne.s32.totalorder %s177, %s180
      %p189 = scmp.eq.s32.totalorder %s20, 1
      %p190 = por %p188, %p189
      %p191 = scmp.ne.s32.totalorder %s180, %s181
      %p192 = scmp.eq.s32.totalorder %s20, 0
      %p193 = por %p191, %p192
      %p194 = scmp.ne.s32.totalorder %s180, %s181
      %p195 = scmp.eq.s32.totalorder %s21, 1
      %p196 = por %p194, %p195
      %p198 = scmp.ne.s32.totalorder %s181, %s197
      %p199 = scmp.eq.s32.totalorder %s21, 0
      %p200 = por %p198, %p199
      %p201 = scmp.le.s32.totalorder 1, %s15
      %p202 = scmp.lt.s32.totalorder %s15, 3
      %p203 = pnand %p201, %p202
      %p204 = pneg %p203
      // Predicated region
      $region9: #{tpu_custom_call.1} parent=5 // pred_check
        _
      $region10: #{tpu_custom_call.1} parent=5 // pred_check_branch
        %206 = sbr.rel (%p203) target = $region12
      $region11: #{tpu_custom_call.1} parent=5 // pred_region
        %s207 = ssub.s32 %s15, 1
        // Predicated region
        $region13: #{tpu_custom_call.1} parent=11 // pred_check
          %p208 = pneg %p62
        $region14: #{tpu_custom_call.1} parent=11 // pred_check_branch
          %210 = sbr.rel (%p208) target = $region16
        $region15: #{tpu_custom_call.1} parent=11 // pred_region
          %212 = vsyncadd [#allocation3], 0
          %s214 = sshll.u32 %s1, 4
          %s215 = int_to_ptr.hbm [resolvable:$true] %s214
          %s216 = sshll.u32 [#allocation2], 4
          %s217 = int_to_ptr.vmem [resolvable:$true] %s216
          %219 = dma.hbm_to_vmem [thread:$0]  %s215, 128, %s217, [#allocation3]
        $region16: #{tpu_custom_call.1} parent=11 // pred_fallthru
          _
        // Predicated region
        $region17: #{tpu_custom_call.1} parent=11 // pred_check
          %p220 = pneg %p83
        $region18: #{tpu_custom_call.1} parent=11 // pred_check_branch
          %222 = sbr.rel (%p220) target = $region20
        $region19: #{tpu_custom_call.1} parent=11 // pred_region
          _
        $region20: #{tpu_custom_call.1} parent=11 // pred_fallthru
          _
        // Predicated region
        $region21: #{tpu_custom_call.1} parent=11 // pred_check
          %p223 = pneg %p104
        $region22: #{tpu_custom_call.1} parent=11 // pred_check_branch
          %225 = sbr.rel (%p223) target = $region24
        $region23: #{tpu_custom_call.1} parent=11 // pred_region
          %227 = vsyncadd [#allocation5], 0
          %s229 = sshll.u32 %s3, 4
          %s230 = int_to_ptr.hbm [resolvable:$true] %s229
          %s231 = sshll.u32 [#allocation4], 4
          %s232 = int_to_ptr.vmem [resolvable:$true] %s231
          %234 = dma.hbm_to_vmem [thread:$0]  %s230, 128, %s232, [#allocation5]
        $region24: #{tpu_custom_call.1} parent=11 // pred_fallthru
          _
        // Predicated region
        $region25: #{tpu_custom_call.1} parent=11 // pred_check
          %p235 = pneg %p125
        $region26: #{tpu_custom_call.1} parent=11 // pred_check_branch
          %237 = sbr.rel (%p235) target = $region28
        $region27: #{tpu_custom_call.1} parent=11 // pred_region
          _
        $region28: #{tpu_custom_call.1} parent=11 // pred_fallthru
          _
        // Predicated region
        $region29: #{tpu_custom_call.1} parent=11 // pred_check
          %p238 = pneg %p146
        $region30: #{tpu_custom_call.1} parent=11 // pred_check_branch
          %240 = sbr.rel (%p238) target = $region32
        $region31: #{tpu_custom_call.1} parent=11 // pred_region
          _
        $region32: #{tpu_custom_call.1} parent=11 // pred_fallthru
          _
        // Predicated region
        $region33: #{tpu_custom_call.1} parent=11 // pred_check
          %p241 = pneg %p167
        $region34: #{tpu_custom_call.1} parent=11 // pred_check_branch
          %243 = sbr.rel (%p241) target = $region36
        $region35: #{tpu_custom_call.1} parent=11 // pred_region
          _
        $region36: #{tpu_custom_call.1} parent=11 // pred_fallthru
          _
      $region12: #{tpu_custom_call.1} parent=5 // pred_fallthru
        _
      %p244 = scmp.lt.s32.totalorder %s15, 2
      // Predicated region
      $region37: #{tpu_custom_call.1} parent=5 // pred_check
        %p245 = pneg %p244
      $region38: #{tpu_custom_call.1} parent=5 // pred_check_branch
        %247 = sbr.rel (%p245) target = $region40
      $region39: #{tpu_custom_call.1} parent=5 // pred_region
        // Predicated region
        $region41: #{tpu_custom_call.1} parent=39 // pred_check
          %p248 = pneg %p35
        $region42: #{tpu_custom_call.1} parent=39 // pred_check_branch
          %250 = sbr.rel (%p248) target = $region44
        $region43: #{tpu_custom_call.1} parent=39 // pred_region
          %p251 = scmp.lt.s32.totalorder %s15, 1
          %s252 = scalar_select %p251, %s15, 1
          %s253 = smul.addr %s252, 2
          %s254 = smul.addr %s253, 4
          %s255 = scalar_lea.vmem %s0, %s254
        $region44: #{tpu_custom_call.1} parent=39 // pred_fallthru
          _
      $region40: #{tpu_custom_call.1} parent=5 // pred_fallthru
        _
      %p256 = scmp.le.s32.totalorder 1, %s15
      %p257 = scmp.lt.s32.totalorder %s15, 3
      %p258 = pnand %p256, %p257
      %p259 = pneg %p258
      // Predicated region
      $region45: #{tpu_custom_call.1} parent=5 // pred_check
        _
      $region46: #{tpu_custom_call.1} parent=5 // pred_check_branch
        %261 = sbr.rel (%p258) target = $region48
      $region47: #{tpu_custom_call.1} parent=5 // pred_region
        %s262 = ssub.s32 %s15, 1
        // Predicated region
        $region49: #{tpu_custom_call.1} parent=47 // pred_check
          %p263 = pneg %p62
        $region50: #{tpu_custom_call.1} parent=47 // pred_check_branch
          %265 = sbr.rel (%p263) target = $region52
        $region51: #{tpu_custom_call.1} parent=47 // pred_region
          %267 = dma.done [#allocation3], 128
        $region52: #{tpu_custom_call.1} parent=47 // pred_fallthru
          _
        // Predicated region
        $region53: #{tpu_custom_call.1} parent=47 // pred_check
          %p268 = pneg %p104
        $region54: #{tpu_custom_call.1} parent=47 // pred_check_branch
          %270 = sbr.rel (%p268) target = $region56
        $region55: #{tpu_custom_call.1} parent=47 // pred_region
          %272 = dma.done [#allocation5], 128
        $region56: #{tpu_custom_call.1} parent=47 // pred_fallthru
          _
        %p273 = scmp.lt.s32.totalorder %s20, 1
        %s274 = scalar_select %p273, %s20, 1
        %s275 = smul.addr %s274, 2
        %s276 = smul.addr %s275, 4
        %s277 = scalar_lea.vmem %s0, %s276
        %p278 = pneg %p41
        %p279 = pneg %p38
        %p280 = pneg %p62
        %p281 = pneg %p59
        %p282 = pneg %p83
        %p283 = pneg %p80
        %p284 = pneg %p104
        %p285 = pneg %p101
        %p286 = pneg %p125
        %p287 = pneg %p122
        %p288 = pneg %p146
        %p289 = pneg %p143
        %p290 = pneg %p167
        %p291 = pneg %p164
        %p292 = pneg %p193
        %p293 = pneg %p190
        %p294 = scmp.lt.s32.totalorder %s20, 1
        %s295 = scalar_select %p294, %s20, 1
        %s296 = smul.addr %s295, 2
        %s297 = smul.addr %s296, 4
        %s298 = scalar_lea.vmem %s7, %s297
        %p299 = scmp.lt.s32.totalorder %s20, 1
        %s300 = scalar_select %p299, %s20, 1
        %s301 = smul.addr %s300, 2
        %s302 = smul.addr %s301, 4
        %s303 = scalar_lea.vmem %s0, %s302
        %p304 = scmp.lt.s32.totalorder %s20, 1
        %s305 = scalar_select %p304, %s20, 1
        %s306 = smul.addr %s305, 2
        %s307 = smul.addr %s306, 4
        %s308 = scalar_lea.vmem %s7, %s307
        %v309 = vlaneseq
        %v310 = vand.u32 %v309, 127
        %v311 = vadd.s32 %v310, 128
        %vm312 = vcmp.lt.s32.totalorder %v310, 0
        %v313 = vsub.s32 0, %v310
        %v314 = vsel %vm312, %v313, %v310
        %v315 = vshrl.u32 %v314, 4
        %v316 = vand.u32 %v314, 15
        %v317 = vsub.s32 0, %v316
        %v318 = vsel %vm312, %v317, %v316
        %vm319 = vcmp.lt.s32.totalorder %v311, 0
        %v320 = vsub.s32 0, %v311
        %v321 = vsel %vm319, %v320, %v311
        %v322 = vshrl.u32 %v321, 4
        %v323 = vand.u32 %v321, 15
        %v324 = vsub.s32 0, %v323
        %v325 = vsel %vm319, %v324, %v323
        %vm326 = vcmp.ne.s32.totalorder %v318, 0
        %vm327 = vcmp.ne.s32.totalorder %v325, 0
        %vm328 = vcmp.lt.s32.totalorder %v318, 0
        %vm329 = vcmp.lt.s32.totalorder %v325, 0
        %vm330 = vmand %vm328, %vm326
        %vm331 = vmand %vm329, %vm327
        %v332 = vadd.s32 %v318, 16
        %v333 = vadd.s32 %v325, 16
        %v334 = vsel %vm330, %v332, %v318
        %v335 = vsel %vm331, %v333, %v325
        %vm336 = vcmp.gt.s32.totalorder %v334, 0
        %vm337 = vcmp.gt.s32.totalorder %v335, 0
        %vm338 = vcmp.lt.s32.totalorder %v334, 15
        %vm339 = vcmp.lt.s32.totalorder %v335, 15
        %v340 = vld [vmem:[%s303] sm:$0xff]
        %342 = vst [vmem:[#allocation1] ss:$2 sm:$0xff] %v340
        %v343 = vld.sshfl [vmem:[#allocation1] sm:$0xff pattern:$0x75316420]
        %v344 = vld.sshfl [vmem:[#allocation1 + $0x8] sm:$0xff pattern:$0x75316420]
        %v347 = vsel %vm336, 1, 0
        %v348 = vsel %vm337, 1, 0
        %vm349 = vcmp.eq.s32.totalorder %v347, 1
        %vm350 = vcmp.eq.s32.totalorder %v348, 1
        %352 = vrot.lane.b32.xlu0 0.0, 17
        %v353 = vpop.permute.xlu0 %352
        %354 = vrot.lane.b32.xlu0 %v343, 17
        %v355 = vpop.permute.xlu0 %354
        %356 = vrot.lane.b32.xlu0 %v344, 17
        %v357 = vpop.permute.xlu0 %356
        %vm358 = vcmask 138240
        %v359 = vsel %vm358, %v353, %v355
        %v360 = vsel %vm358, %v355, %v357
        %v363 = vsel %vm349, %v359, 0.0
        %v364 = vsel %vm350, %v360, 0.0
        %v365 = vsel %vm338, 1, 0
        %v366 = vsel %vm339, 1, 0
        %vm367 = vcmp.eq.s32.totalorder %v365, 1
        %vm368 = vcmp.eq.s32.totalorder %v366, 1
        %369 = vrot.lane.b32.xlu0 0.0, 15
        %v370 = vpop.permute.xlu0 %369
        %371 = vrot.lane.b32.xlu0 %v343, 15
        %v372 = vpop.permute.xlu0 %371
        %373 = vrot.lane.b32.xlu0 %v344, 15
        %v374 = vpop.permute.xlu0 %373
        %vm375 = vcmask 121856
        %v376 = vsel %vm375, %v370, %v372
        %v377 = vsel %vm375, %v372, %v374
        %v380 = vsel %vm367, %v376, 0.0
        %v381 = vsel %vm368, %v377, 0.0
        %382 = vrot.lane.b32.xlu0 0.0, 1
        %v383 = vpop.permute.xlu0 %382
        %384 = vrot.lane.b32.xlu0 %v343, 1
        %v385 = vpop.permute.xlu0 %384
        %386 = vrot.lane.b32.xlu0 %v344, 1
        %v387 = vpop.permute.xlu0 %386
        %vm388 = vcmask 7168
        %v389 = vsel %vm388, %v383, %v385
        %v390 = vsel %vm388, %v385, %v387
        %v393 = vsel %vm349, %v389, 0.0
        %v394 = vsel %vm350, %v390, 0.0
        %395 = vrot.lane.b32.xlu0 %v343, 127
        %v396 = vpop.permute.xlu0 %395
        %397 = vrot.lane.b32.xlu0 %v344, 127
        %v398 = vpop.permute.xlu0 %397
        %399 = vrot.lane.b32.xlu0 0.0, 127
        %v400 = vpop.permute.xlu0 %399
        %vm401 = vcmask 1039360
        %v402 = vsel %vm401, %v396, %v398
        %v403 = vsel %vm401, %v398, %v400
        %v406 = vsel %vm367, %v402, 0.0
        %v407 = vsel %vm368, %v403, 0.0
        %408 = vrot.lane.b32.xlu0 %v343, 113
        %v409 = vpop.permute.xlu0 %408
        %410 = vrot.lane.b32.xlu0 %v344, 113
        %v411 = vpop.permute.xlu0 %410
        %412 = vrot.lane.b32.xlu0 0.0, 113
        %v413 = vpop.permute.xlu0 %412
        %vm414 = vcmask 924672
        %v415 = vsel %vm414, %v409, %v411
        %v416 = vsel %vm414, %v411, %v413
        %v419 = vsel %vm349, %v415, 0.0
        %v420 = vsel %vm350, %v416, 0.0
        %421 = vrot.lane.b32.xlu0 %v343, 111
        %v422 = vpop.permute.xlu0 %421
        %423 = vrot.lane.b32.xlu0 %v344, 111
        %v424 = vpop.permute.xlu0 %423
        %425 = vrot.lane.b32.xlu0 0.0, 111
        %v426 = vpop.permute.xlu0 %425
        %vm427 = vcmask 908288
        %v428 = vsel %vm427, %v422, %v424
        %v429 = vsel %vm427, %v424, %v426
        %v432 = vsel %vm367, %v428, 0.0
        %v433 = vsel %vm368, %v429, 0.0
        %v434 = vrot.slane 0.0, 4
        %v435 = vrot.slane %v343, 4
        %v436 = vrot.slane %v344, 4
        %437 = vrot.lane.b32.xlu0 %v434, 16
        %v438 = vpop.permute.xlu0 %437
        %439 = vrot.lane.b32.xlu0 %v435, 16
        %v440 = vpop.permute.xlu0 %439
        %441 = vrot.lane.b32.xlu0 %v436, 16
        %v442 = vpop.permute.xlu0 %441
        %vm443 = vcmask 130048
        %v444 = vsel %vm443, %v438, %v440
        %v445 = vsel %vm443, %v440, %v442
        %v450 = vrot.slane %v393, 4
        %v451 = vrot.slane %v394, 4
        %v456 = vrot.slane %v406, 4
        %v457 = vrot.slane %v407, 4
        %460 = vrot.lane.b32.xlu0 %v435, 112
        %v461 = vpop.permute.xlu0 %460
        %462 = vrot.lane.b32.xlu0 %v436, 112
        %v463 = vpop.permute.xlu0 %462
        %464 = vrot.lane.b32.xlu0 %v434, 112
        %v465 = vpop.permute.xlu0 %464
        %vm466 = vcmask 916480
        %v467 = vsel %vm466, %v461, %v463
        %v468 = vsel %vm466, %v463, %v465
        %vm471 = vcmask 1043456
        %v472 = vsel %vm471, %v363, %v444
        %v473 = vsel %vm471, %v364, %v445
        %v474 = vsel %vm471, %v380, %v450
        %v475 = vsel %vm471, %v381, %v451
        %v476 = vsel %vm471, %v343, %v456
        %v477 = vsel %vm471, %v344, %v457
        %v478 = vsel %vm471, %v419, %v467
        %v479 = vsel %vm471, %v420, %v468
        %v480 = vld [vmem:[#allocation2] sm:$0xff]
        %v481 = vld [vmem:[%s2] sm:$0xff]
        %483 = vset.pattern.permute.xlu0 0
        %484 = vperm.xlu0 %483, %v481
        %v485 = vpop.permute.xlu0 %484
        %vm487 = vcmask 293888
        %v489 = vsel %vm487, %v480, 0
        %v492 = vsel %vm471, %v432, 0
        %v495 = vsel %vm471, %v433, 0
        %497 = vmatpush.msra.mxu0 0.0
        %498 = vmatpush.msra.mxu0 0.0
        %499 = vmatpush.msra.mxu0 0.0
        %500 = vmatpush.msra.mxu0 0.0
        %501 = vmatpush.msra.mxu0 0.0
        %502 = vmatpush.msra.mxu0 0.0
        %503 = vmatpush.msra.mxu0 0.0
        %504 = vmatpush.msra.mxu0 0.0
        %505 = vmatpush.msra.mxu0 0.0
        %506 = vmatpush.msra.mxu0 0.0
        %507 = vmatpush.msra.mxu0 0.0
        %508 = vmatpush.msra.mxu0 %v492
        %509 = vmatpush.msra.mxu0 %v478
        %510 = vmatpush.msra.mxu0 %v476
        %511 = vmatpush.msra.mxu0 %v474
        %512 = vmatpush.msra.mxu0 %v472
        %513 = vmatmul.f32.gmra.mxu0 %v489
        %v514 = vpop.f32.mrf.mxu0
        %v515 = vadd.f32 %v485, %v514
        %516 = vdwg.mxu0
        %517 = vmatpush.msra.mxu0 0.0
        %518 = vmatpush.msra.mxu0 0.0
        %519 = vmatpush.msra.mxu0 0.0
        %520 = vmatpush.msra.mxu0 0.0
        %521 = vmatpush.msra.mxu0 0.0
        %522 = vmatpush.msra.mxu0 0.0
        %523 = vmatpush.msra.mxu0 0.0
        %524 = vmatpush.msra.mxu0 0.0
        %525 = vmatpush.msra.mxu0 0.0
        %526 = vmatpush.msra.mxu0 0.0
        %527 = vmatpush.msra.mxu0 0.0
        %528 = vmatpush.msra.mxu0 %v495
        %529 = vmatpush.msra.mxu0 %v479
        %530 = vmatpush.msra.mxu0 %v477
        %531 = vmatpush.msra.mxu0 %v475
        %532 = vmatpush.msra.mxu0 %v473
        %533 = vmatmul.f32.gmra.mxu0 %v489
        %v534 = vpop.f32.mrf.mxu0
        %v535 = vadd.f32 %v485, %v534
        %536 = vdwg.mxu0
        %vm537 = vcmp.gt.f32.partialorder %v515, 0.0
        %vm538 = vcmp.gt.f32.partialorder %v535, 0.0
        %v539 = vmul.f32 %v515, 0.1
        %v540 = vmul.f32 %v535, 0.1
        %v541 = vsel %vm537, %v515, %v539
        %v542 = vsel %vm538, %v535, %v540
        %545 = vrot.lane.b32.xlu0 %v541, 17
        %v546 = vpop.permute.xlu0 %545
        %547 = vrot.lane.b32.xlu0 %v542, 17
        %v548 = vpop.permute.xlu0 %547
        %v549 = vsel %vm358, %v353, %v546
        %v550 = vsel %vm358, %v546, %v548
        %v553 = vsel %vm349, %v549, 0.0
        %v554 = vsel %vm350, %v550, 0.0
        %555 = vrot.lane.b32.xlu0 %v541, 15
        %v556 = vpop.permute.xlu0 %555
        %557 = vrot.lane.b32.xlu0 %v542, 15
        %v558 = vpop.permute.xlu0 %557
        %v559 = vsel %vm375, %v370, %v556
        %v560 = vsel %vm375, %v556, %v558
        %v563 = vsel %vm367, %v559, 0.0
        %v564 = vsel %vm368, %v560, 0.0
        %565 = vrot.lane.b32.xlu0 %v541, 1
        %v566 = vpop.permute.xlu0 %565
        %567 = vrot.lane.b32.xlu0 %v542, 1
        %v568 = vpop.permute.xlu0 %567
        %v569 = vsel %vm388, %v383, %v566
        %v570 = vsel %vm388, %v566, %v568
        %v573 = vsel %vm349, %v569, 0.0
        %v574 = vsel %vm350, %v570, 0.0
        %575 = vrot.lane.b32.xlu0 %v541, 127
        %v576 = vpop.permute.xlu0 %575
        %577 = vrot.lane.b32.xlu0 %v542, 127
        %v578 = vpop.permute.xlu0 %577
        %v579 = vsel %vm401, %v576, %v578
        %v580 = vsel %vm401, %v578, %v400
        %v583 = vsel %vm367, %v579, 0.0
        %v584 = vsel %vm368, %v580, 0.0
        %585 = vrot.lane.b32.xlu0 %v541, 113
        %v586 = vpop.permute.xlu0 %585
        %587 = vrot.lane.b32.xlu0 %v542, 113
        %v588 = vpop.permute.xlu0 %587
        %v589 = vsel %vm414, %v586, %v588
        %v590 = vsel %vm414, %v588, %v413
        %v593 = vsel %vm349, %v589, 0.0
        %v594 = vsel %vm350, %v590, 0.0
        %595 = vrot.lane.b32.xlu0 %v541, 111
        %v596 = vpop.permute.xlu0 %595
        %597 = vrot.lane.b32.xlu0 %v542, 111
        %v598 = vpop.permute.xlu0 %597
        %v599 = vsel %vm427, %v596, %v598
        %v600 = vsel %vm427, %v598, %v426
        %v603 = vsel %vm367, %v599, 0.0
        %v604 = vsel %vm368, %v600, 0.0
        %605 = vrot.lane.b32.xlu0 0.0, 16
        %v606 = vpop.permute.xlu0 %605
        %607 = vrot.lane.b32.xlu0 %v541, 16
        %v608 = vpop.permute.xlu0 %607
        %609 = vrot.lane.b32.xlu0 %v542, 16
        %v610 = vpop.permute.xlu0 %609
        %v611 = vsel %vm443, %v606, %v608
        %v612 = vsel %vm443, %v608, %v610
        %615 = vrot.lane.b32.xlu0 %v541, 112
        %v616 = vpop.permute.xlu0 %615
        %617 = vrot.lane.b32.xlu0 %v542, 112
        %v618 = vpop.permute.xlu0 %617
        %619 = vrot.lane.b32.xlu0 0.0, 112
        %v620 = vpop.permute.xlu0 %619
        %v621 = vsel %vm466, %v616, %v618
        %v622 = vsel %vm466, %v618, %v620
        %v625 = vld [vmem:[#allocation4] sm:$0xff]
        %v626 = vld [vmem:[%s4] sm:$0xff]
        %628 = vset.pattern.permute.xlu0 0
        %629 = vperm.xlu0 %628, %v626
        %v630 = vpop.permute.xlu0 %629
        %vm632 = vcmask 588800
        %v634 = vsel %vm632, %v625, 0
        %636 = vmatpush.msra.mxu0 0.0
        %637 = vmatpush.msra.mxu0 0.0
        %638 = vmatpush.msra.mxu0 0.0
        %639 = vmatpush.msra.mxu0 0.0
        %640 = vmatpush.msra.mxu0 0.0
        %641 = vmatpush.msra.mxu0 0.0
        %642 = vmatpush.msra.mxu0 0.0
        %643 = vmatpush.msra.mxu0 %v603
        %644 = vmatpush.msra.mxu0 %v621
        %645 = vmatpush.msra.mxu0 %v593
        %646 = vmatpush.msra.mxu0 %v583
        %647 = vmatpush.msra.mxu0 %v541
        %648 = vmatpush.msra.mxu0 %v573
        %649 = vmatpush.msra.mxu0 %v563
        %650 = vmatpush.msra.mxu0 %v611
        %651 = vmatpush.msra.mxu0 %v553
        %652 = vmatmul.f32.gmra.mxu0 %v634
        %v653 = vpop.f32.mrf.mxu0
        %v654 = vadd.f32 %v630, %v653
        %655 = vdwg.mxu0
        %656 = vmatpush.msra.mxu0 0.0
        %657 = vmatpush.msra.mxu0 0.0
        %658 = vmatpush.msra.mxu0 0.0
        %659 = vmatpush.msra.mxu0 0.0
        %660 = vmatpush.msra.mxu0 0.0
        %661 = vmatpush.msra.mxu0 0.0
        %662 = vmatpush.msra.mxu0 0.0
        %663 = vmatpush.msra.mxu0 %v604
        %664 = vmatpush.msra.mxu0 %v622
        %665 = vmatpush.msra.mxu0 %v594
        %666 = vmatpush.msra.mxu0 %v584
        %667 = vmatpush.msra.mxu0 %v542
        %668 = vmatpush.msra.mxu0 %v574
        %669 = vmatpush.msra.mxu0 %v564
        %670 = vmatpush.msra.mxu0 %v612
        %671 = vmatpush.msra.mxu0 %v554
        %672 = vmatmul.f32.gmra.mxu0 %v634
        %v673 = vpop.f32.mrf.mxu0
        %v674 = vadd.f32 %v630, %v673
        %675 = vdwg.mxu0
        %vm676 = vcmp.gt.f32.partialorder %v654, 0.0
        %vm677 = vcmp.gt.f32.partialorder %v674, 0.0
        %v678 = vmul.f32 %v654, 0.1
        %v679 = vmul.f32 %v674, 0.1
        %v680 = vsel %vm676, %v654, %v678
        %v681 = vsel %vm677, %v674, %v679
        %684 = vrot.lane.b32.xlu0 %v680, 17
        %v685 = vpop.permute.xlu0 %684
        %686 = vrot.lane.b32.xlu0 %v681, 17
        %v687 = vpop.permute.xlu0 %686
        %v688 = vsel %vm358, %v353, %v685
        %v689 = vsel %vm358, %v685, %v687
        %v692 = vsel %vm349, %v688, 0.0
        %v693 = vsel %vm350, %v689, 0.0
        %694 = vrot.lane.b32.xlu0 %v680, 15
        %v695 = vpop.permute.xlu0 %694
        %696 = vrot.lane.b32.xlu0 %v681, 15
        %v697 = vpop.permute.xlu0 %696
        %v698 = vsel %vm375, %v370, %v695
        %v699 = vsel %vm375, %v695, %v697
        %v702 = vsel %vm367, %v698, 0.0
        %v703 = vsel %vm368, %v699, 0.0
        %704 = vrot.lane.b32.xlu0 %v680, 1
        %v705 = vpop.permute.xlu0 %704
        %706 = vrot.lane.b32.xlu0 %v681, 1
        %v707 = vpop.permute.xlu0 %706
        %v708 = vsel %vm388, %v383, %v705
        %v709 = vsel %vm388, %v705, %v707
        %v712 = vsel %vm349, %v708, 0.0
        %v713 = vsel %vm350, %v709, 0.0
        %714 = vrot.lane.b32.xlu0 %v680, 127
        %v715 = vpop.permute.xlu0 %714
        %716 = vrot.lane.b32.xlu0 %v681, 127
        %v717 = vpop.permute.xlu0 %716
        %v718 = vsel %vm401, %v715, %v717
        %v719 = vsel %vm401, %v717, %v400
        %v722 = vsel %vm367, %v718, 0.0
        %v723 = vsel %vm368, %v719, 0.0
        %724 = vrot.lane.b32.xlu0 %v680, 113
        %v725 = vpop.permute.xlu0 %724
        %726 = vrot.lane.b32.xlu0 %v681, 113
        %v727 = vpop.permute.xlu0 %726
        %v728 = vsel %vm414, %v725, %v727
        %v729 = vsel %vm414, %v727, %v413
        %v732 = vsel %vm349, %v728, 0.0
        %v733 = vsel %vm350, %v729, 0.0
        %734 = vrot.lane.b32.xlu0 %v680, 111
        %v735 = vpop.permute.xlu0 %734
        %736 = vrot.lane.b32.xlu0 %v681, 111
        %v737 = vpop.permute.xlu0 %736
        %v738 = vsel %vm427, %v735, %v737
        %v739 = vsel %vm427, %v737, %v426
        %v742 = vsel %vm367, %v738, 0.0
        %v743 = vsel %vm368, %v739, 0.0
        %744 = vrot.lane.b32.xlu0 %v680, 16
        %v745 = vpop.permute.xlu0 %744
        %746 = vrot.lane.b32.xlu0 %v681, 16
        %v747 = vpop.permute.xlu0 %746
        %v748 = vsel %vm443, %v606, %v745
        %v749 = vsel %vm443, %v745, %v747
        %752 = vrot.lane.b32.xlu0 %v680, 112
        %v753 = vpop.permute.xlu0 %752
        %754 = vrot.lane.b32.xlu0 %v681, 112
        %v755 = vpop.permute.xlu0 %754
        %v756 = vsel %vm466, %v753, %v755
        %v757 = vsel %vm466, %v755, %v620
        %v760 = vld [vmem:[%s5] sm:$0x7]
        %v761 = vld [vmem:[%s6] sm:$0x7]
        %763 = vset.pattern.permute.xlu0 0
        %764 = vperm.xlu0 %763, %v761
        %v765 = vpop.permute.xlu0 %764
        %v768 = vsel %vm632, %v760, 0
        %770 = vmatpush.msra.mxu0 0.0
        %771 = vmatpush.msra.mxu0 0.0
        %772 = vmatpush.msra.mxu0 0.0
        %773 = vmatpush.msra.mxu0 0.0
        %774 = vmatpush.msra.mxu0 0.0
        %775 = vmatpush.msra.mxu0 0.0
        %776 = vmatpush.msra.mxu0 0.0
        %777 = vmatpush.msra.mxu0 %v742
        %778 = vmatpush.msra.mxu0 %v756
        %779 = vmatpush.msra.mxu0 %v732
        %780 = vmatpush.msra.mxu0 %v722
        %781 = vmatpush.msra.mxu0 %v680
        %782 = vmatpush.msra.mxu0 %v712
        %783 = vmatpush.msra.mxu0 %v702
        %784 = vmatpush.msra.mxu0 %v748
        %785 = vmatpush.msra.mxu0 %v692
        %786 = vmatmul.f32.gmra.mxu0 %v768
        %v787 = vpop.f32.mrf.mxu0
        %v788 = vadd.f32 %v765, %v787
        %789 = vdwg.mxu0
        %790 = vmatpush.msra.mxu0 0.0
        %791 = vmatpush.msra.mxu0 0.0
        %792 = vmatpush.msra.mxu0 0.0
        %793 = vmatpush.msra.mxu0 0.0
        %794 = vmatpush.msra.mxu0 0.0
        %795 = vmatpush.msra.mxu0 0.0
        %796 = vmatpush.msra.mxu0 0.0
        %797 = vmatpush.msra.mxu0 %v743
        %798 = vmatpush.msra.mxu0 %v757
        %799 = vmatpush.msra.mxu0 %v733
        %800 = vmatpush.msra.mxu0 %v723
        %801 = vmatpush.msra.mxu0 %v681
        %802 = vmatpush.msra.mxu0 %v713
        %803 = vmatpush.msra.mxu0 %v703
        %804 = vmatpush.msra.mxu0 %v749
        %805 = vmatpush.msra.mxu0 %v693
        %806 = vmatmul.f32.gmra.mxu0 %v768
        %v807 = vpop.f32.mrf.mxu0
        %v808 = vadd.f32 %v765, %v807
        %809 = vdwg.mxu0
        %v812 = vrot.slane %v808, 4
        %v813 = vsel %vm471, %v788, %v812
        %815 = vst [vmem:[%s308] sm:$0x77] %v813
        %p816 = scmp.lt.s32.totalorder %s20, 1
        %s817 = scalar_select %p816, %s20, 1
        %s818 = smul.addr %s817, 2
        %s819 = smul.addr %s818, 4
        %s820 = scalar_lea.vmem %s7, %s819
        // Predicated region
        $region57: #{tpu_custom_call.1} parent=47 // pred_check
          %p821 = pneg %p190
        $region58: #{tpu_custom_call.1} parent=47 // pred_check_branch
          %823 = sbr.rel (%p821) target = $region60
        $region59: #{tpu_custom_call.1} parent=47 // pred_region
          _
        $region60: #{tpu_custom_call.1} parent=47 // pred_fallthru
          _
      $region48: #{tpu_custom_call.1} parent=5 // pred_fallthru
        _
      %p824 = scmp.le.s32.totalorder 2, %s15
      // Predicated region
      $region61: #{tpu_custom_call.1} parent=5 // pred_check
        %p825 = pneg %p824
      $region62: #{tpu_custom_call.1} parent=5 // pred_check_branch
        %827 = sbr.rel (%p825) target = $region64
      $region63: #{tpu_custom_call.1} parent=5 // pred_region
        %s828 = ssub.s32 %s15, 2
        // Predicated region
        $region65: #{tpu_custom_call.1} parent=63 // pred_check
          %p829 = pneg %p196
        $region66: #{tpu_custom_call.1} parent=63 // pred_check_branch
          %831 = sbr.rel (%p829) target = $region68
        $region67: #{tpu_custom_call.1} parent=63 // pred_region
          %p832 = scmp.lt.s32.totalorder %s21, 1
          %s833 = scalar_select %p832, %s21, 1
          %s834 = smul.addr %s833, 2
          %s835 = smul.addr %s834, 4
          %s836 = scalar_lea.vmem %s7, %s835
        $region68: #{tpu_custom_call.1} parent=63 // pred_fallthru
          _
      $region64: #{tpu_custom_call.1} parent=5 // pred_fallthru
        _
    $region6: #{tpu_custom_call.1} parent=1 // loop_footer
      %s19 = sadd.s32 1, %s15
    $region7: #{tpu_custom_call.1} parent=1 // loop_footer_branch
      %14 = sbr.rel target = $region3
    $region8: #{tpu_custom_call.1} parent=1 // loop_exit
      _
    %837 = vsyncpa [#allocation3], 1
    %s838 = scalar_lea.sflag [#allocation3], 1
    %839 = vsyncpa %s838, 1
    %840 = vsyncpa [#allocation5], 1

</llo_original>
